<compile_context>
chip_gen: v7x
topology: tpu7x:2x2x1
jax: 0.10.0
libtpu: 0.0.40
codegen_flags: <defaults>
</compile_context>

<pallas_src>
import functools

import jax
import jax.numpy as jnp
from jax.experimental import pallas as pl
from jax.experimental.pallas import tpu as pltpu

_LANE = 128


def _round_up(n, m):
    return ((n + m - 1) // m) * m


# ---------------------------------------------------------------------------
# One-time hardware / capability probes (never wrapped around the real call).
# ---------------------------------------------------------------------------
@functools.lru_cache(maxsize=1)
def _tpu_limits():
    """Return (vmem_limit_bytes, vmem_budget_bytes, num_tensorcores)."""
    phys_vmem = 128 * 1024 * 1024              # v5e/v6e physical VMEM per core
    try:
        info = pltpu.get_tpu_info()
        phys_vmem = int(getattr(info, "vmem_capacity_bytes", phys_vmem))
    except Exception:                           # hint gathering only; stay safe
        pass
    num_cores = 1
    try:
        kind = jax.devices()[0].device_kind.lower()
        if "v7" in kind:                        # v7x: 2 TensorCores per chip
            num_cores = 2
            phys_vmem = min(phys_vmem, 64 * 1024 * 1024)
    except Exception:
        pass
    vmem_limit = min(phys_vmem // 2, 64 * 1024 * 1024)  # scoped limit we request
    vmem_budget = int(vmem_limit * 0.9)                 # what the sizing loop uses
    return vmem_limit, vmem_budget, num_cores


@functools.lru_cache(maxsize=1)
def _buffered_weights_supported():
    """Compile a tiny probe once to verify pipeline_mode=pl.Buffered(1) lowers."""
    if not hasattr(pl, "Buffered"):
        return False

    def _probe(a_ref, o_ref):
        o_ref[...] = a_ref[...]

    try:
        f = pl.pallas_call(
            _probe,
            out_shape=jax.ShapeDtypeStruct((8, 128), jnp.float32),
            grid_spec=pltpu.PrefetchScalarGridSpec(
                num_scalar_prefetch=0,
                grid=(1,),
                in_specs=[pl.BlockSpec((8, 128), lambda i: (0, 0),
                                       pipeline_mode=pl.Buffered(1))],
                out_specs=pl.BlockSpec((8, 128), lambda i: (0, 0)),
            ),
        )
        jax.jit(f).lower(jnp.zeros((8, 128), jnp.float32)).compile()
        return True
    except Exception:
        return False


# ---------------------------------------------------------------------------
# Kernel
# ---------------------------------------------------------------------------
def a2c_kernel(x_ref, w1_ref, b1_ref, wh_ref, bh_ref, out_ref):
    # fc1 + relu:  [bm, obs] @ [obs, hid_p] + [1, hid_p]   (f32 accumulate)
    x = x_ref[...].astype(w1_ref.dtype)
    h = jnp.dot(x, w1_ref[...], preferred_element_type=jnp.float32)
    h = jnp.maximum(h + b1_ref[...], 0.0)
    # fused policy|value head:  [bm, hid_p] @ [hid_p, out_p] + [1, out_p]
    o = jnp.dot(h.astype(wh_ref.dtype), wh_ref[...],
                preferred_element_type=jnp.float32)
    out_ref[...] = (o + bh_ref[...]).astype(out_ref.dtype)


# ---------------------------------------------------------------------------
# Parameter prep (hoisted: once per parameter update, not per forward)
# ---------------------------------------------------------------------------
def prepare_a2c_params(w1, b1, w_policy, b_policy, w_value, b_value, *,
                       compute_dtype=None):
    """Pad / fuse the weights once.

    Weights are stored [in, out] (transposed vs. PyTorch's [out, in]).  The
    policy and value heads are concatenated column-wise into a single
    [hid, act+1] matmul, padded lane-dense to 128 columns.  Biases stay f32.
    On v6e/v7x pass compute_dtype=jnp.bfloat16 for ~2-3x MXU throughput.
    """
    obs, hid = w1.shape
    act = w_policy.shape[1]
    hid_p = _round_up(hid, _LANE)
    out_p = _round_up(act + 1, _LANE)
    wdt = jnp.dtype(compute_dtype) if compute_dtype is not None else w1.dtype

    w1_p = jnp.pad(w1.astype(wdt), ((0, 0), (0, hid_p - hid)))
    b1_p = jnp.pad(b1.astype(jnp.float32).reshape(1, hid),
                   ((0, 0), (0, hid_p - hid)))
    w_heads = jnp.concatenate([w_policy, w_value], axis=1).astype(wdt)
    b_heads = jnp.concatenate([b_policy, b_value]).astype(jnp.float32)
    wh_p = jnp.pad(w_heads, ((0, hid_p - hid), (0, out_p - (act + 1))))
    bh_p = jnp.pad(b_heads.reshape(1, act + 1),
                   ((0, 0), (0, out_p - (act + 1))))

    return {
        "w1_p": w1_p, "b1_p": b1_p, "wh_p": wh_p, "bh_p": bh_p,
        "obs": obs, "hid": hid, "act": act, "hid_p": hid_p, "out_p": out_p,
    }


# ---------------------------------------------------------------------------
# pallas_call construction + forward
# ---------------------------------------------------------------------------
def _build_call(Bp, obs, hid_p, out_p, block_m, x_dtype, w_dtype, out_dtype,
                vmem_limit, single_buffer_weights):
    if single_buffer_weights:
        def wspec(shape):
            # Grid-invariant block: resident in VMEM, no redundant 2nd buffer.
            return pl.BlockSpec(shape, lambda i: (0, 0),
                                pipeline_mode=pl.Buffered(1))
    else:
        def wspec(shape):
            return pl.BlockSpec(shape, lambda i: (0, 0))

    xb = jnp.dtype(x_dtype).itemsize
    wb = jnp.dtype(w_dtype).itemsize
    ob = jnp.dtype(out_dtype).itemsize
    cost = pl.CostEstimate(
        flops=2 * Bp * (obs * hid_p + hid_p * out_p),
        transcendentals=0,
        bytes_accessed=(Bp * obs * xb
                        + (obs * hid_p + hid_p * out_p) * wb
                        + 4 * (hid_p + out_p)
                        + Bp * out_p * ob))

    return pl.pallas_call(
        a2c_kernel,
        out_shape=jax.ShapeDtypeStruct((Bp, out_p), out_dtype),
        grid_spec=pltpu.PrefetchScalarGridSpec(
            num_scalar_prefetch=0,
            grid=(Bp // block_m,),
            in_specs=[
                # x batch tile; obs is NOT lane-padded (block dim == array dim).
                pl.BlockSpec((block_m, obs), lambda i: (i, 0)),
                wspec((obs, hid_p)),      # W1        (resident)
                wspec((1, hid_p)),        # b1  (f32)
                wspec((hid_p, out_p)),    # [Wp | Wv] (resident)
                wspec((1, out_p)),        # [bp | bv] (f32)
            ],
            out_specs=pl.BlockSpec((block_m, out_p), lambda i: (i, 0)),
        ),
        compiler_params=pltpu.CompilerParams(
            dimension_semantics=("parallel",),
            vmem_limit_bytes=vmem_limit),
        cost_estimate=cost,
    )


def a2c_net_forward(x, params, *, block_m=None, out_dtype=jnp.float32):
    """A2CNet forward.  `params` comes from prepare_a2c_params (hoisted prep).

    Returns (policy [B, act], value [B, 1]).
    """
    B, obs = x.shape
    assert obs == params["obs"], "x feature dim does not match prepared params"
    hid_p, out_p, act = params["hid_p"], params["out_p"], params["act"]
    w_dtype = params["w1_p"].dtype

    vmem_limit, vmem_budget, num_cores = _tpu_limits()
    single_buffer = _buffered_weights_supported()

    # bf16 inputs pack 16 rows per sublane tile; f32 packs 8.
    sublane = 16 if x.dtype == jnp.bfloat16 else 8
    Bp = _round_up(B, sublane)

    if block_m is None:
        block_m = min(Bp, 1024)
        # Split across cores only on multi-TC parts (v7x) and only when each
        # core still gets >= 256 rows; on 1-TC parts the grid is a serial loop
        # and splitting just adds ~0.35us/step for zero parallelism.
        if num_cores >= 2 and Bp // block_m < num_cores and Bp >= num_cores * 256:
            block_m = _round_up(pl.cdiv(Bp, num_cores), sublane)
    block_m = max(sublane, _round_up(block_m, sublane))

    # VMEM sizing: weights counted once when single-buffered (2x only for the
    # default double-buffered fallback); x/out tiles are double-buffered by the
    # pipeline; the f32 intermediate activation tile is counted once.
    wfac = 1 if single_buffer else 2
    weight_bytes = wfac * (jnp.dtype(w_dtype).itemsize * (obs * hid_p + hid_p * out_p)
                           + 4 * (hid_p + out_p))
    xb = jnp.dtype(x.dtype).itemsize
    ob = jnp.dtype(out_dtype).itemsize

    def tile_bytes(bm):
        return 2 * bm * (xb * obs + ob * out_p) + 4 * bm * hid_p

    while block_m > sublane and weight_bytes + tile_bytes(block_m) > vmem_budget:
        block_m = max(sublane, _round_up(block_m // 2, sublane))
    Bp = _round_up(Bp, block_m)

    # Only the batch is padded; obs stays unpadded (no 128-lane x inflation).
    x_p = jnp.pad(x, ((0, Bp - B), (0, 0)))

    call = _build_call(Bp, obs, hid_p, out_p, block_m, x.dtype, w_dtype,
                       out_dtype, vmem_limit, single_buffer)
    out = call(x_p, params["w1_p"], params["b1_p"],
               params["wh_p"], params["bh_p"])

    policy = out[:B, :act]
    value = out[:B, act:act + 1]
    return policy, value


def init_a2c_params(key, obs_size, act_size, hid_size=128, dtype=jnp.float32):
    """Deterministic init mimicking nn.Linear default (uniform +/- 1/sqrt(fan_in))."""
    k = jax.random.split(key, 6)
    bound1 = 1.0 / (obs_size ** 0.5)
    bound2 = 1.0 / (hid_size ** 0.5)
    # Stored as [in, out] (transpose of PyTorch's [out, in]).
    w1 = jax.random.uniform(k[0], (obs_size, hid_size), dtype, -bound1, bound1)
    b1 = jax.random.uniform(k[1], (hid_size,), dtype, -bound1, bound1)
    wp = jax.random.uniform(k[2], (hid_size, act_size), dtype, -bound2, bound2)
    bp = jax.random.uniform(k[3], (act_size,), dtype, -bound2, bound2)
    wv = jax.random.uniform(k[4], (hid_size, 1), dtype, -bound2, bound2)
    bv = jax.random.uniform(k[5], (1,), dtype, -bound2, bound2)
    return w1, b1, wp, bp, wv, bv


if __name__ == "__main__":
    # Small shapes consistent with A2CNet(obs_size, act_size, hid_size).
    B, obs_size, act_size, hid_size = 8, 16, 8, 32

    key = jax.random.PRNGKey(0)
    kx, kp = jax.random.split(key)
    x = jax.random.normal(kx, (B, obs_size), jnp.float32)
    w1, b1, wp, bp, wv, bv = init_a2c_params(kp, obs_size, act_size, hid_size)

    # Weight prep hoisted: run once per parameter update, reuse every forward.
    # (On v6e/v7x pass compute_dtype=jnp.bfloat16 for ~2-3x MXU throughput;
    #  kept f32 here so the result matches the f32 reference exactly.)
    params = prepare_a2c_params(w1, b1, wp, bp, wv, bv)

    policy, value = a2c_net_forward(x, params)
    policy, value = jax.block_until_ready((policy, value))

    # Pure-JAX reference for semantics.
    h_ref = jnp.maximum(x @ w1 + b1, 0.0)
    policy_ref = h_ref @ wp + bp
    value_ref = h_ref @ wv + bv

    assert policy.shape == (B, act_size)
    assert value.shape == (B, 1)
    assert jnp.allclose(policy, policy_ref, atol=1e-5, rtol=1e-5)
    assert jnp.allclose(value, value_ref, atol=1e-5, rtol=1e-5)

    print("KERNEL_OK")
</pallas_src>

<mosaic_0001>
module attributes {stable_mosaic.version = 11 : i64} {
  func.func @a2c_kernel(%arg0: i32, %arg1: memref<8x16xf32, #tpu.memory_space<vmem>>, %arg2: memref<16x128xf32, #tpu.memory_space<vmem>>, %arg3: memref<1x128xf32, #tpu.memory_space<vmem>>, %arg4: memref<128x128xf32, #tpu.memory_space<vmem>>, %arg5: memref<1x128xf32, #tpu.memory_space<vmem>>, %arg6: memref<8x128xf32, #tpu.memory_space<vmem>>) attributes {dimension_semantics = [#tpu.dimension_semantics<parallel>], iteration_bounds = array<i64: 1>, scalar_prefetch = 0 : i64, scratch_operands = 0 : i64, tpu.core_type = #tpu.core_type<tc>, window_params = [{transform_indices = @transform_0, window_bounds = array<i64: 8, 16>}, {pipeline_mode = #tpu.pipeline_mode<synchronous>, transform_indices = @transform_1, window_bounds = array<i64: 16, 128>}, {pipeline_mode = #tpu.pipeline_mode<synchronous>, transform_indices = @transform_2, window_bounds = array<i64: 1, 128>}, {pipeline_mode = #tpu.pipeline_mode<synchronous>, transform_indices = @transform_3, window_bounds = array<i64: 128, 128>}, {pipeline_mode = #tpu.pipeline_mode<synchronous>, transform_indices = @transform_4, window_bounds = array<i64: 1, 128>}, {transform_indices = @transform_5, window_bounds = array<i64: 8, 128>}]} {
    %c0 = arith.constant 0 : index
    %c0_0 = arith.constant 0 : index
    %0 = vector.load %arg1[%c0, %c0_0] : memref<8x16xf32, #tpu.memory_space<vmem>>, vector<8x16xf32>
    %c0_1 = arith.constant 0 : index
    %c0_2 = arith.constant 0 : index
    %1 = vector.load %arg2[%c0_1, %c0_2] : memref<16x128xf32, #tpu.memory_space<vmem>>, vector<16x128xf32>
    %cst = arith.constant dense<0.000000e+00> : vector<8x128xf32>
    %2 = tpu.matmul %0, %1, %cst {dimension_numbers = #tpu.dot_dimension_numbers<[1], [0], [0], [1], [0, 0, 1, 1], [], []>} : vector<8x16xf32>, vector<16x128xf32>, vector<8x128xf32> -> vector<8x128xf32>
    %c0_3 = arith.constant 0 : index
    %c0_4 = arith.constant 0 : index
    %3 = vector.load %arg3[%c0_3, %c0_4] : memref<1x128xf32, #tpu.memory_space<vmem>>, vector<1x128xf32>
    %4 = vector.broadcast %3 : vector<1x128xf32> to vector<8x128xf32>
    %5 = arith.addf %2, %4 : vector<8x128xf32>
    %cst_5 = arith.constant 0.000000e+00 : f32
    %6 = vector.broadcast %cst_5 : f32 to vector<8x128xf32>
    %7 = arith.maximumf %5, %6 : vector<8x128xf32>
    %c0_6 = arith.constant 0 : index
    %c0_7 = arith.constant 0 : index
    %8 = vector.load %arg4[%c0_6, %c0_7] : memref<128x128xf32, #tpu.memory_space<vmem>>, vector<128x128xf32>
    %cst_8 = arith.constant dense<0.000000e+00> : vector<8x128xf32>
    %9 = tpu.matmul %7, %8, %cst_8 {dimension_numbers = #tpu.dot_dimension_numbers<[1], [0], [0], [1], [0, 0, 1, 1], [], []>} : vector<8x128xf32>, vector<128x128xf32>, vector<8x128xf32> -> vector<8x128xf32>
    %c0_9 = arith.constant 0 : index
    %c0_10 = arith.constant 0 : index
    %10 = vector.load %arg5[%c0_9, %c0_10] : memref<1x128xf32, #tpu.memory_space<vmem>>, vector<1x128xf32>
    %11 = vector.broadcast %10 : vector<1x128xf32> to vector<8x128xf32>
    %12 = arith.addf %9, %11 : vector<8x128xf32>
    %c0_11 = arith.constant 0 : index
    %c0_12 = arith.constant 0 : index
    %13 = vector.load %arg6[%c0_11, %c0_12] : memref<8x128xf32, #tpu.memory_space<vmem>>, vector<8x128xf32>
    tpu.vector_store %arg6[%c0_11, %c0_12], %12 {strides = array<i32>} : memref<8x128xf32, #tpu.memory_space<vmem>>, vector<8x128xf32>,
    return
  }
  func.func @transform_0(%arg0: i32) -> (i32, i32) {
    %c0_i32 = arith.constant 0 : i32
    %c0_i32_0 = arith.constant 0 : i32
    return %arg0, %c0_i32 : i32, i32
  }
  func.func @transform_1(%arg0: i32) -> (i32, i32) {
    %c0_i32 = arith.constant 0 : i32
    %c0_i32_0 = arith.constant 0 : i32
    %c0_i32_1 = arith.constant 0 : i32
    return %c0_i32, %c0_i32_0 : i32, i32
  }
  func.func @transform_2(%arg0: i32) -> (i32, i32) {
    %c0_i32 = arith.constant 0 : i32
    %c0_i32_0 = arith.constant 0 : i32
    %c0_i32_1 = arith.constant 0 : i32
    return %c0_i32, %c0_i32_0 : i32, i32
  }
  func.func @transform_3(%arg0: i32) -> (i32, i32) {
    %c0_i32 = arith.constant 0 : i32
    %c0_i32_0 = arith.constant 0 : i32
    %c0_i32_1 = arith.constant 0 : i32
    return %c0_i32, %c0_i32_0 : i32, i32
  }
  func.func @transform_4(%arg0: i32) -> (i32, i32) {
    %c0_i32 = arith.constant 0 : i32
    %c0_i32_0 = arith.constant 0 : i32
    %c0_i32_1 = arith.constant 0 : i32
    return %c0_i32, %c0_i32_0 : i32, i32
  }
  func.func @transform_5(%arg0: i32) -> (i32, i32) {
    %c0_i32 = arith.constant 0 : i32
    %c0_i32_0 = arith.constant 0 : i32
    return %arg0, %c0_i32 : i32, i32
  }
}

</mosaic_0001>

<llo_original>
// kernel: tpu_custom_call.1
$region0: #{tpu_custom_call.1}
  #allocation0 [shape = 'u32[]', space=smem, size = 0x4, offset = 0x4, fixed_abs, tag = 'smem constant byte address 0x4 - core index']
  #allocation1 [shape = 'u32[144,128]{1,0:T(1,128)}', space=vmem, size = 0x12000, scoped, tag = 'internal scratch']
  %s0 = inlined_call_operand.hbm [shape: f32[8,16], index: 0, kind: input, shape index: {}]
  %s1 = inlined_call_operand.hbm [shape: f32[16,128], index: 1, kind: input, shape index: {}]
  %s2 = inlined_call_operand.hbm [shape: f32[1,128], index: 2, kind: input, shape index: {}]
  %s3 = inlined_call_operand.hbm [shape: f32[128,128], index: 3, kind: input, shape index: {}]
  %s4 = inlined_call_operand.hbm [shape: f32[1,128], index: 4, kind: input, shape index: {}]
  %s5 = inlined_call_operand.hbm [shape: f32[8,128], index: 5, kind: output, shape index: {}]
  %s6 = sld [smem:[#allocation0]]
  $region50: #{tpu_custom_call.1} parent=0
    _
  %s8 = ssub.s32 1, %s6
  %s9 = scalar_select 0, %s8, %s6
  $region1: #{tpu_custom_call.1} parent=0
    #allocation2 [shape = 'u8[4096]{0}', space=vmem, size = 0x1000, scoped, tag = 'input window, operand 0, single buffered']
    #allocation3 [shape = 's32[1]{0}', space=sflag, size = 0x4, scoped, tag = 'scoped memory for tpu_custom_call.1']
    #allocation4 [shape = 's32[1]{0}', space=sflag, size = 0x4, scoped, tag = 'scoped memory for tpu_custom_call.1']
    #allocation5 [shape = 'u8[8192]{0}', space=vmem, size = 0x2000, scoped, tag = 'input window, operand 1, single buffered']
    #allocation6 [shape = 's32[1]{0}', space=sflag, size = 0x4, scoped, tag = 'scoped memory for tpu_custom_call.1']
    #allocation7 [shape = 'u8[512]{0}', space=vmem, size = 0x400, scoped, tag = 'input window, operand 2, single buffered']
    #allocation8 [shape = 'u8[65536]{0}', space=vmem, size = 0x10000, scoped, tag = 'input window, operand 3, single buffered']
    #allocation9 [shape = 's32[1]{0}', space=sflag, size = 0x4, scoped, tag = 'scoped memory for tpu_custom_call.1']
    #allocation10 [shape = 'u8[512]{0}', space=vmem, size = 0x400, scoped, tag = 'input window, operand 4, single buffered']
    #allocation11 [shape = 'u8[4096]{0}', space=vmem, size = 0x1000, scoped, tag = 'output window, operand 0, single buffered']
    %10 = vsyncpa [#allocation3], 0
    %11 = vsyncpa [#allocation6], 0
    %12 = vsyncpa [#allocation9], 0
    %13 = vsyncpa [#allocation4], 0
    // Predicated region
    $region2: #{tpu_custom_call.1} parent=1 // pred_check
      _
    $region3: #{tpu_custom_call.1} parent=1 // pred_check_branch
      %15 = sbr.rel (0) target = $region5
    $region4: #{tpu_custom_call.1} parent=1 // pred_region
      %s17 = ssub.s32 128, 128
      %18 = vsyncadd [#allocation3], %s17
      %s20 = sshll.u32 [#allocation2], 4
      %s21 = int_to_ptr.vmem [resolvable:$true] %s20
      %23 = dma.hbm_to_vmem [thread:$0]  %s0, 128, %s21, [#allocation3]
    $region5: #{tpu_custom_call.1} parent=1 // pred_fallthru
      _
    // Predicated region
    $region6: #{tpu_custom_call.1} parent=1 // pred_check
      _
    $region7: #{tpu_custom_call.1} parent=1 // pred_check_branch
      %25 = sbr.rel (0) target = $region9
    $region8: #{tpu_custom_call.1} parent=1 // pred_region
      %s27 = ssub.s32 256, 256
      %28 = vsyncadd [#allocation6], %s27
      %s29 = sshll.u32 [#allocation5], 4
      %s30 = int_to_ptr.vmem [resolvable:$true] %s29
      %35 = dma.hbm_to_vmem [thread:$0]  %s1, 256, %s30, [#allocation6], 128, 128, 8
    $region9: #{tpu_custom_call.1} parent=1 // pred_fallthru
      _
    // Predicated region
    $region10: #{tpu_custom_call.1} parent=1 // pred_check
      _
    $region11: #{tpu_custom_call.1} parent=1 // pred_check_branch
      %37 = sbr.rel (0) target = $region13
    $region12: #{tpu_custom_call.1} parent=1 // pred_region
      %s39 = ssub.s32 16, 16
      %40 = vsyncadd [#allocation6], %s39
      %s42 = sshll.u32 [#allocation7], 4
      %s43 = int_to_ptr.vmem [resolvable:$true] %s42
      %45 = dma.hbm_to_vmem [thread:$0]  %s2, 16, %s43, [#allocation6]
    $region13: #{tpu_custom_call.1} parent=1 // pred_fallthru
      _
    // Predicated region
    $region14: #{tpu_custom_call.1} parent=1 // pred_check
      _
    $region15: #{tpu_custom_call.1} parent=1 // pred_check_branch
      %47 = sbr.rel (0) target = $region17
    $region16: #{tpu_custom_call.1} parent=1 // pred_region
      %s49 = ssub.s32 2048, 2048
      %50 = vsyncadd [#allocation9], %s49
      %s51 = sshll.u32 [#allocation8], 4
      %s52 = int_to_ptr.vmem [resolvable:$true] %s51
      %57 = dma.hbm_to_vmem [thread:$0]  %s3, 2048, %s52, [#allocation9], 128, 128, 8
    $region17: #{tpu_custom_call.1} parent=1 // pred_fallthru
      _
    // Predicated region
    $region18: #{tpu_custom_call.1} parent=1 // pred_check
      _
    $region19: #{tpu_custom_call.1} parent=1 // pred_check_branch
      %59 = sbr.rel (0) target = $region21
    $region20: #{tpu_custom_call.1} parent=1 // pred_region
      %s61 = ssub.s32 16, 16
      %62 = vsyncadd [#allocation9], %s61
      %s64 = sshll.u32 [#allocation10], 4
      %s65 = int_to_ptr.vmem [resolvable:$true] %s64
      %67 = dma.hbm_to_vmem [thread:$0]  %s4, 16, %s65, [#allocation9]
    $region21: #{tpu_custom_call.1} parent=1 // pred_fallthru
      _
    // Predicated region
    $region22: #{tpu_custom_call.1} parent=1 // pred_check
      _
    $region23: #{tpu_custom_call.1} parent=1 // pred_check_branch
      %69 = sbr.rel (0) target = $region25
    $region24: #{tpu_custom_call.1} parent=1 // pred_region
      %70 = dma.done [#allocation3], 128
    $region25: #{tpu_custom_call.1} parent=1 // pred_fallthru
      _
    // Predicated region
    $region26: #{tpu_custom_call.1} parent=1 // pred_check
      _
    $region27: #{tpu_custom_call.1} parent=1 // pred_check_branch
      %72 = sbr.rel (0) target = $region29
    $region28: #{tpu_custom_call.1} parent=1 // pred_region
      %73 = dma.done [#allocation6], 256
    $region29: #{tpu_custom_call.1} parent=1 // pred_fallthru
      _
    // Predicated region
    $region30: #{tpu_custom_call.1} parent=1 // pred_check
      _
    $region31: #{tpu_custom_call.1} parent=1 // pred_check_branch
      %75 = sbr.rel (0) target = $region33
    $region32: #{tpu_custom_call.1} parent=1 // pred_region
      %76 = dma.done [#allocation6], 16
    $region33: #{tpu_custom_call.1} parent=1 // pred_fallthru
      _
    // Predicated region
    $region34: #{tpu_custom_call.1} parent=1 // pred_check
      _
    $region35: #{tpu_custom_call.1} parent=1 // pred_check_branch
      %78 = sbr.rel (0) target = $region37
    $region36: #{tpu_custom_call.1} parent=1 // pred_region
      %79 = dma.done [#allocation9], 2048
    $region37: #{tpu_custom_call.1} parent=1 // pred_fallthru
      _
    // Predicated region
    $region38: #{tpu_custom_call.1} parent=1 // pred_check
      _
    $region39: #{tpu_custom_call.1} parent=1 // pred_check_branch
      %81 = sbr.rel (0) target = $region41
    $region40: #{tpu_custom_call.1} parent=1 // pred_region
      %82 = dma.done [#allocation9], 16
    $region41: #{tpu_custom_call.1} parent=1 // pred_fallthru
      _
    %v83 = vld [vmem:[#allocation2] sm:$0xff]
    %v84 = vld [vmem:[#allocation5] sm:$0xff]
    %v85 = vld [vmem:[#allocation5 + $0x8] sm:$0xff]
    %v86 = vld [vmem:[#allocation7] sm:$0x1]
    %v88 = vlaneseq
    %v89 = vshrl.u32 %v88, 7
    %v90 = vsub.s32 0, %v89
    %v91 = vrot.slane %v86, %v90
    %vm93 = vcmask 130048
    %v95 = vsel %vm93, %v83, 0
    %97 = vmatprep.subr.mxu0 0.0
    %98 = vmatpush1.msra.mxu0 %v84
    %99 = vmatprep.subr.mxu0 0.0
    %100 = vmatpush1.msra.mxu0 %v85
    %101 = vmatprep.subr.mxu0 0.0
    %102 = vmatpush1.msra.mxu0 0.0
    %103 = vmatprep.subr.mxu0 0.0
    %104 = vmatpush1.msra.mxu0 0.0
    %105 = vmatprep.subr.mxu0 0.0
    %106 = vmatpush1.msra.mxu0 0.0
    %107 = vmatprep.subr.mxu0 0.0
    %108 = vmatpush1.msra.mxu0 0.0
    %109 = vmatprep.subr.mxu0 0.0
    %110 = vmatpush1.msra.mxu0 0.0
    %111 = vmatprep.subr.mxu0 0.0
    %112 = vmatpush1.msra.mxu0 0.0
    %113 = vmatprep.subr.mxu0 0.0
    %114 = vmatpush1.msra.mxu0 0.0
    %115 = vmatprep.subr.mxu0 0.0
    %116 = vmatpush1.msra.mxu0 0.0
    %117 = vmatprep.subr.mxu0 0.0
    %118 = vmatpush1.msra.mxu0 0.0
    %119 = vmatprep.subr.mxu0 0.0
    %120 = vmatpush1.msra.mxu0 0.0
    %121 = vmatprep.subr.mxu0 0.0
    %122 = vmatpush1.msra.mxu0 0.0
    %123 = vmatprep.subr.mxu0 0.0
    %124 = vmatpush1.msra.mxu0 0.0
    %125 = vmatprep.subr.mxu0 0.0
    %126 = vmatpush1.msra.mxu0 0.0
    %127 = vmatprep.subr.mxu0 0.0
    %128 = vmatpush1.msra.mxu0 0.0
    %129 = vmatprep.subr.mxu0 0.0
    %130 = vmatpush1.msra.mxu0 0.0
    %131 = vmatprep.subr.mxu0 0.0
    %132 = vmatpush1.msra.mxu0 0.0
    %133 = vmatprep.subr.mxu0 0.0
    %134 = vmatpush1.msra.mxu0 0.0
    %135 = vmatprep.subr.mxu0 0.0
    %136 = vmatpush1.msra.mxu0 0.0
    %137 = vmatprep.subr.mxu0 0.0
    %138 = vmatpush1.msra.mxu0 0.0
    %139 = vmatprep.subr.mxu0 0.0
    %140 = vmatpush1.msra.mxu0 0.0
    %141 = vmatprep.subr.mxu0 0.0
    %142 = vmatpush1.msra.mxu0 0.0
    %143 = vmatprep.subr.mxu0 0.0
    %144 = vmatpush1.msra.mxu0 0.0
    %145 = vmatprep.subr.mxu0 0.0
    %146 = vmatpush1.msra.mxu0 0.0
    %147 = vmatprep.subr.mxu0 0.0
    %148 = vmatpush1.msra.mxu0 0.0
    %149 = vmatprep.subr.mxu0 0.0
    %150 = vmatpush1.msra.mxu0 0.0
    %151 = vmatprep.subr.mxu0 0.0
    %152 = vmatpush1.msra.mxu0 0.0
    %153 = vmatprep.subr.mxu0 0.0
    %154 = vmatpush1.msra.mxu0 0.0
    %155 = vmatprep.subr.mxu0 0.0
    %156 = vmatpush1.msra.mxu0 0.0
    %157 = vmatprep.subr.mxu0 0.0
    %158 = vmatpush1.msra.mxu0 0.0
    %159 = vmatprep.subr.mxu0 0.0
    %160 = vmatpush1.msra.mxu0 0.0
    %161 = vmatprep.mubr.f32.mxu0 0.0
    %162 = vmatmul.mubr.f32.gmra.mrb[0].mxu0 %v95
    %v163 = vpop.f32.mrb[0].mxu0
    %v164 = vadd.f32 %v91, %v163
    %v165 = vpop.f32.mrb[0].mxu0
    %166 = vdwg.mxu0
    %v167 = vmax.f32 %v164, 0.0
    %v168 = vld [vmem:[#allocation8] sm:$0xff]
    %v169 = vld [vmem:[#allocation8 + $0x8] sm:$0xff]
    %v170 = vld [vmem:[#allocation8 + $0x10] sm:$0xff]
    %v171 = vld [vmem:[#allocation8 + $0x18] sm:$0xff]
    %v172 = vld [vmem:[#allocation8 + $0x20] sm:$0xff]
    %v173 = vld [vmem:[#allocation8 + $0x28] sm:$0xff]
    %v174 = vld [vmem:[#allocation8 + $0x30] sm:$0xff]
    %v175 = vld [vmem:[#allocation8 + $0x38] sm:$0xff]
    %v176 = vld [vmem:[#allocation8 + $0x40] sm:$0xff]
    %v177 = vld [vmem:[#allocation8 + $0x48] sm:$0xff]
    %v178 = vld [vmem:[#allocation8 + $0x50] sm:$0xff]
    %v179 = vld [vmem:[#allocation8 + $0x58] sm:$0xff]
    %v180 = vld [vmem:[#allocation8 + $0x60] sm:$0xff]
    %v181 = vld [vmem:[#allocation8 + $0x68] sm:$0xff]
    %v182 = vld [vmem:[#allocation8 + $0x70] sm:$0xff]
    %v183 = vld [vmem:[#allocation8 + $0x78] sm:$0xff]
    %v184 = vld [vmem:[#allocation10] sm:$0x1]
    %v186 = vlaneseq
    %v187 = vshrl.u32 %v186, 7
    %v188 = vsub.s32 0, %v187
    %v189 = vrot.slane %v184, %v188
    %191 = vmatprep.subr.mxu0 0.0
    %192 = vmatpush1.msra.mxu0 %v168
    %193 = vmatprep.subr.mxu0 0.0
    %194 = vmatpush1.msra.mxu0 %v169
    %195 = vmatprep.subr.mxu0 0.0
    %196 = vmatpush1.msra.mxu0 %v170
    %197 = vmatprep.subr.mxu0 0.0
    %198 = vmatpush1.msra.mxu0 %v171
    %199 = vmatprep.subr.mxu0 0.0
    %200 = vmatpush1.msra.mxu0 %v172
    %201 = vmatprep.subr.mxu0 0.0
    %202 = vmatpush1.msra.mxu0 %v173
    %203 = vmatprep.subr.mxu0 0.0
    %204 = vmatpush1.msra.mxu0 %v174
    %205 = vmatprep.subr.mxu0 0.0
    %206 = vmatpush1.msra.mxu0 %v175
    %207 = vmatprep.subr.mxu0 0.0
    %208 = vmatpush1.msra.mxu0 %v176
    %209 = vmatprep.subr.mxu0 0.0
    %210 = vmatpush1.msra.mxu0 %v177
    %211 = vmatprep.subr.mxu0 0.0
    %212 = vmatpush1.msra.mxu0 %v178
    %213 = vmatprep.subr.mxu0 0.0
    %214 = vmatpush1.msra.mxu0 %v179
    %215 = vmatprep.subr.mxu0 0.0
    %216 = vmatpush1.msra.mxu0 %v180
    %217 = vmatprep.subr.mxu0 0.0
    %218 = vmatpush1.msra.mxu0 %v181
    %219 = vmatprep.subr.mxu0 0.0
    %220 = vmatpush1.msra.mxu0 %v182
    %221 = vmatprep.subr.mxu0 0.0
    %222 = vmatpush1.msra.mxu0 %v183
    %223 = vmatprep.subr.mxu0 0.0
    %224 = vmatpush1.msra.mxu0 0.0
    %225 = vmatprep.subr.mxu0 0.0
    %226 = vmatpush1.msra.mxu0 0.0
    %227 = vmatprep.subr.mxu0 0.0
    %228 = vmatpush1.msra.mxu0 0.0
    %229 = vmatprep.subr.mxu0 0.0
    %230 = vmatpush1.msra.mxu0 0.0
    %231 = vmatprep.subr.mxu0 0.0
    %232 = vmatpush1.msra.mxu0 0.0
    %233 = vmatprep.subr.mxu0 0.0
    %234 = vmatpush1.msra.mxu0 0.0
    %235 = vmatprep.subr.mxu0 0.0
    %236 = vmatpush1.msra.mxu0 0.0
    %237 = vmatprep.subr.mxu0 0.0
    %238 = vmatpush1.msra.mxu0 0.0
    %239 = vmatprep.subr.mxu0 0.0
    %240 = vmatpush1.msra.mxu0 0.0
    %241 = vmatprep.subr.mxu0 0.0
    %242 = vmatpush1.msra.mxu0 0.0
    %243 = vmatprep.subr.mxu0 0.0
    %244 = vmatpush1.msra.mxu0 0.0
    %245 = vmatprep.subr.mxu0 0.0
    %246 = vmatpush1.msra.mxu0 0.0
    %247 = vmatprep.subr.mxu0 0.0
    %248 = vmatpush1.msra.mxu0 0.0
    %249 = vmatprep.subr.mxu0 0.0
    %250 = vmatpush1.msra.mxu0 0.0
    %251 = vmatprep.subr.mxu0 0.0
    %252 = vmatpush1.msra.mxu0 0.0
    %253 = vmatprep.subr.mxu0 0.0
    %254 = vmatpush1.msra.mxu0 0.0
    %255 = vmatprep.mubr.f32.mxu0 0.0
    %256 = vmatmul.mubr.f32.gmra.mrb[0].mxu0 %v167
    %v257 = vpop.f32.mrb[0].mxu0
    %v258 = vadd.f32 %v189, %v257
    %v259 = vpop.f32.mrb[0].mxu0
    %260 = vdwg.mxu0
    %261 = vst [vmem:[#allocation11] sm:$0xff] %v258
    // Predicated region
    $region42: #{tpu_custom_call.1} parent=1 // pred_check
      _
    $region43: #{tpu_custom_call.1} parent=1 // pred_check_branch
      %263 = sbr.rel (0) target = $region45
    $region44: #{tpu_custom_call.1} parent=1 // pred_region
      %s265 = ssub.s32 128, 128
      %266 = vsyncadd [#allocation4], %s265
      %s268 = sshll.u32 [#allocation11], 4
      %s269 = int_to_ptr.vmem [resolvable:$true] %s268
      %271 = dma.vmem_to_hbm [thread:$0]  %s269, 128, %s5, [#allocation4]
    $region45: #{tpu_custom_call.1} parent=1 // pred_fallthru
      _
    // Predicated region
    $region46: #{tpu_custom_call.1} parent=1 // pred_check
      _
    $region47: #{tpu_custom_call.1} parent=1 // pred_check_branch
      %273 = sbr.rel (0) target = $region49
    $region48: #{tpu_custom_call.1} parent=1 // pred_region
      %274 = dma.done [#allocation4], 128
    $region49: #{tpu_custom_call.1} parent=1 // pred_fallthru
      _
    %275 = vsyncpa [#allocation3], 1
    %276 = vsyncpa [#allocation6], 1
    %277 = vsyncpa [#allocation9], 1
    %278 = vsyncpa [#allocation4], 1

</llo_original>
